<compile_context>
chip_gen: v6e
topology: v6e:2x2x1
jax: 0.10.0
libtpu: 0.0.40
codegen_flags: <defaults>
</compile_context>

<pallas_src>
import functools

import jax
import jax.numpy as jnp
from jax.experimental import pallas as pl
from jax.experimental.pallas import tpu as pltpu


def _se_kernel(x_ref, w1t_ref, w2t_ref, b2_ref, o_ref, acc_ref, *,
               inv_hw, inv_temp):
    hw = pl.program_id(1)

    @pl.when(hw == 0)
    def _init():
        acc_ref[...] = jnp.zeros_like(acc_ref)

    # Partial spatial sum for this (n_tile, hw_tile, C) slab.  Accumulate in
    # f32 without materializing an upcast copy of the whole tile.
    acc_ref[...] += jnp.sum(x_ref[...], axis=1, dtype=jnp.float32)

    @pl.when(hw == pl.num_programs(1) - 1)
    def _finalize():
        # AdaptiveAvgPool2d(1): divide by the true H*W (constant multiply).
        pooled = acc_ref[...] * inv_hw                           # (n_tile, C) f32

        # fc1: 1x1 conv == matmul (no bias), then ReLU.
        h = jnp.dot(pooled, w1t_ref[...].astype(jnp.float32),
                    preferred_element_type=jnp.float32)          # (n_tile, hidden)
        h = jnp.maximum(h, 0.0)

        # fc2: 1x1 conv == matmul + bias.
        logits = jnp.dot(h, w2t_ref[...].astype(jnp.float32),
                         preferred_element_type=jnp.float32)
        logits = logits + b2_ref[...].astype(jnp.float32)        # (n_tile, K)

        # softmax(logits / temperature, dim=1)
        z = logits * inv_temp
        z = z - jnp.max(z, axis=-1, keepdims=True)
        e = jnp.exp(z)
        denom = jnp.sum(e, axis=-1, keepdims=True)
        o_ref[...] = (e * pl.reciprocal(denom, approx=True)).astype(o_ref.dtype)


def _pick_hw_tile(n_tile, C, HW, itemsize, vmem_budget_bytes=8 << 20):
    """Largest multiple-of-8 HW tile whose slab stays under the per-buffer budget."""
    rows = max(8, vmem_budget_bytes // max(1, n_tile * C * itemsize))
    if rows >= HW:
        return HW
    return max(8, (rows // 8) * 8)


def se_module_forward(x_nchw, w1, w2, b2, temperature, *,
                      hw_tile=None, n_tile=None):
    """x_nchw: (N, C, H, W); w1: (hidden, C, 1, 1); w2: (K, hidden, 1, 1); b2: (K,)."""
    N, C, H, W = x_nchw.shape
    hidden = w1.shape[0]
    K = w2.shape[0]
    HW = H * W

    # Layout plumbing only: channels-last (N, HW, C) so C maps to lanes.
    x = jnp.transpose(x_nchw.reshape(N, C, HW), (0, 2, 1))

    # Tile sizing.
    if n_tile is None:
        n_tile = N if N <= 256 else 256
    n_tile = max(1, min(n_tile, N))
    if hw_tile is None:
        hw_tile = _pick_hw_tile(n_tile, C, HW, jnp.dtype(x.dtype).itemsize)
    hw_tile = min(hw_tile, HW)
    if hw_tile < HW:
        hw_tile = max(8, (hw_tile // 8) * 8)   # (8, 128) sublane constraint

    # Zero-pad partial tiles: padded HW rows add 0 to the sum (mean divides by
    # the true HW); padded batch rows are sliced off after the call.
    hw_pad = (-HW) % hw_tile
    n_pad = (-N) % n_tile
    if hw_pad or n_pad:
        x = jnp.pad(x, ((0, n_pad), (0, hw_pad), (0, 0)))
    Np, HWp = N + n_pad, HW + hw_pad

    # fc weights as matmul operands (1x1 conv == matmul).
    w1t = w1.reshape(hidden, C).T          # (C, hidden)
    w2t = w2.reshape(K, hidden).T          # (hidden, K)
    b2r = b2.reshape(1, K)

    kernel = functools.partial(
        _se_kernel, inv_hw=1.0 / float(HW), inv_temp=1.0 / float(temperature))

    grid = (Np // n_tile, HWp // hw_tile)   # reduction (HW) axis last

    out = pl.pallas_call(
        kernel,
        out_shape=jax.ShapeDtypeStruct((Np, K), x_nchw.dtype),
        grid=grid,
        in_specs=[
            pl.BlockSpec((n_tile, hw_tile, C), lambda n, h: (n, h, 0)),
            pl.BlockSpec((C, hidden), lambda n, h: (0, 0)),
            pl.BlockSpec((hidden, K), lambda n, h: (0, 0)),
            pl.BlockSpec((1, K), lambda n, h: (0, 0)),
        ],
        out_specs=pl.BlockSpec((n_tile, K), lambda n, h: (n, 0)),
        scratch_shapes=[pltpu.VMEM((n_tile, C), jnp.float32)],
        compiler_params=pltpu.CompilerParams(
            dimension_semantics=("parallel", "arbitrary")),
    )(x, w1t, w2t, b2r)

    return out[:N] if n_pad else out


def init_params(key, in_planes, ratios, K):
    """Deterministic synthetic init matching the PyTorch module's shapes/init scheme."""
    hidden_planes = int(in_planes * ratios) + 1
    k1, k2 = jax.random.split(key)
    # kaiming_normal_(mode='fan_out', nonlinearity='relu'):
    #   std = sqrt(2 / fan_out), fan_out = out_channels * kh * kw (kh=kw=1)
    std1 = (2.0 / hidden_planes) ** 0.5
    std2 = (2.0 / K) ** 0.5
    w1 = jax.random.normal(k1, (hidden_planes, in_planes, 1, 1), jnp.float32) * std1
    w2 = jax.random.normal(k2, (K, hidden_planes, 1, 1), jnp.float32) * std2
    b2 = jnp.zeros((K,), jnp.float32)
    return w1, w2, b2


if __name__ == "__main__":
    # Small shapes consistent with the module: batch=2, in_planes=4, spatial=16x16.
    N, C, H, W = 2, 4, 16, 16
    ratios = 0.25          # hidden_planes = int(4 * 0.25) + 1 = 2
    K = 4
    temperature = 4.0

    key = jax.random.PRNGKey(0)
    kx, kp = jax.random.split(key)
    x = jax.random.normal(kx, (N, C, H, W), jnp.float32)
    w1, w2, b2 = init_params(kp, C, ratios, K)

    # hw_tile=128 -> 2-step spatial-reduction grid to exercise the
    # accumulator / pipelining path even at these tiny demo shapes.
    out = se_module_forward(x, w1, w2, b2, temperature, hw_tile=128)
    out = jax.block_until_ready(out)

    # Pure-JAX reference check of the same math.
    pooled = jnp.mean(x, axis=(2, 3))
    h = jnp.maximum(pooled @ w1.reshape(w1.shape[0], C).T, 0.0)
    logits = h @ w2.reshape(K, -1).T + b2
    ref = jax.nn.softmax(logits / temperature, axis=1)
    assert out.shape == (N, K)
    # Tolerance allows for the approximate (EUP) reciprocal in the softmax.
    assert jnp.allclose(out, ref, atol=1e-3, rtol=1e-3)
    assert jnp.allclose(jnp.sum(out, axis=1), jnp.ones((N,)), atol=1e-3)

    print("KERNEL_OK")
</pallas_src>

<mosaic_0001>
module attributes {stable_mosaic.version = 11 : i64} {
  func.func @_se_kernel(%arg0: i32, %arg1: i32, %arg2: memref<2x128x4xf32, #tpu.memory_space<vmem>>, %arg3: memref<4x2xf32, #tpu.memory_space<vmem>>, %arg4: memref<2x4xf32, #tpu.memory_space<vmem>>, %arg5: memref<1x4xf32, #tpu.memory_space<vmem>>, %arg6: memref<2x4xf32, #tpu.memory_space<vmem>>, %arg7: memref<2x4xf32, #tpu.memory_space<vmem>>) attributes {dimension_semantics = [#tpu.dimension_semantics<parallel>, #tpu.dimension_semantics<arbitrary>], iteration_bounds = array<i64: 1, 2>, scalar_prefetch = 0 : i64, scratch_operands = 1 : i64, tpu.core_type = #tpu.core_type<tc>, window_params = [{transform_indices = @transform_0, window_bounds = array<i64: 2, 128, 4>}, {pipeline_mode = #tpu.pipeline_mode<synchronous>, transform_indices = @transform_1, window_bounds = array<i64: 4, 2>}, {pipeline_mode = #tpu.pipeline_mode<synchronous>, transform_indices = @transform_2, window_bounds = array<i64: 2, 4>}, {pipeline_mode = #tpu.pipeline_mode<synchronous>, transform_indices = @transform_3, window_bounds = array<i64: 1, 4>}, {transform_indices = @transform_4, window_bounds = array<i64: 2, 4>}]} {
    %c0_i32 = arith.constant 0 : i32
    %0 = arith.cmpi eq, %arg1, %c0_i32 : i32
    %1 = arith.extui %0 : i1 to i32
    %c0_i32_0 = arith.constant 0 : i32
    %2 = arith.cmpi ne, %1, %c0_i32_0 : i32
    scf.if %2 {
      %cst_8 = arith.constant 0.000000e+00 : f32
      %11 = vector.broadcast %cst_8 : f32 to vector<2x4xf32>
      %c0_9 = arith.constant 0 : index
      %c0_10 = arith.constant 0 : index
      %12 = vector.load %arg7[%c0_9, %c0_10] : memref<2x4xf32, #tpu.memory_space<vmem>>, vector<2x4xf32>
      tpu.vector_store %arg7[%c0_9, %c0_10], %11 {strides = array<i32>} : memref<2x4xf32, #tpu.memory_space<vmem>>, vector<2x4xf32>,
    } else {
    }
    %c0 = arith.constant 0 : index
    %c0_1 = arith.constant 0 : index
    %3 = vector.load %arg7[%c0, %c0_1] : memref<2x4xf32, #tpu.memory_space<vmem>>, vector<2x4xf32>
    %c0_2 = arith.constant 0 : index
    %c0_3 = arith.constant 0 : index
    %c0_4 = arith.constant 0 : index
    %4 = vector.load %arg2[%c0_2, %c0_3, %c0_4] : memref<2x128x4xf32, #tpu.memory_space<vmem>>, vector<2x128x4xf32>
    %cst = arith.constant dense<0.000000e+00> : vector<2x4xf32>
    %5 = vector.multi_reduction <add>, %4, %cst [1] : vector<2x128x4xf32> to vector<2x4xf32>
    %6 = arith.addf %3, %5 : vector<2x4xf32>
    %c0_5 = arith.constant 0 : index
    %c0_6 = arith.constant 0 : index
    %7 = vector.load %arg7[%c0_5, %c0_6] : memref<2x4xf32, #tpu.memory_space<vmem>>, vector<2x4xf32>
    tpu.vector_store %arg7[%c0_5, %c0_6], %6 {strides = array<i32>} : memref<2x4xf32, #tpu.memory_space<vmem>>, vector<2x4xf32>,
    %c1_i32 = arith.constant 1 : i32
    %8 = arith.cmpi eq, %arg1, %c1_i32 : i32
    %9 = arith.extui %8 : i1 to i32
    %c0_i32_7 = arith.constant 0 : i32
    %10 = arith.cmpi ne, %9, %c0_i32_7 : i32
    scf.if %10 {
      %c0_8 = arith.constant 0 : index
      %c0_9 = arith.constant 0 : index
      %11 = vector.load %arg7[%c0_8, %c0_9] : memref<2x4xf32, #tpu.memory_space<vmem>>, vector<2x4xf32>
      %cst_10 = arith.constant 3.906250e-03 : f32
      %12 = vector.broadcast %cst_10 : f32 to vector<2x4xf32>
      %13 = arith.mulf %11, %12 : vector<2x4xf32>
      %c0_11 = arith.constant 0 : index
      %c0_12 = arith.constant 0 : index
      %14 = vector.load %arg3[%c0_11, %c0_12] : memref<4x2xf32, #tpu.memory_space<vmem>>, vector<4x2xf32>
      %cst_13 = arith.constant dense<0.000000e+00> : vector<2x2xf32>
      %15 = tpu.matmul %13, %14, %cst_13 {dimension_numbers = #tpu.dot_dimension_numbers<[1], [0], [0], [1], [0, 0, 1, 1], [], []>} : vector<2x4xf32>, vector<4x2xf32>, vector<2x2xf32> -> vector<2x2xf32>
      %cst_14 = arith.constant 0.000000e+00 : f32
      %16 = vector.broadcast %cst_14 : f32 to vector<2x2xf32>
      %17 = arith.maximumf %15, %16 : vector<2x2xf32>
      %c0_15 = arith.constant 0 : index
      %c0_16 = arith.constant 0 : index
      %18 = vector.load %arg4[%c0_15, %c0_16] : memref<2x4xf32, #tpu.memory_space<vmem>>, vector<2x4xf32>
      %cst_17 = arith.constant dense<0.000000e+00> : vector<2x4xf32>
      %19 = tpu.matmul %17, %18, %cst_17 {dimension_numbers = #tpu.dot_dimension_numbers<[1], [0], [0], [1], [0, 0, 1, 1], [], []>} : vector<2x2xf32>, vector<2x4xf32>, vector<2x4xf32> -> vector<2x4xf32>
      %c0_18 = arith.constant 0 : index
      %c0_19 = arith.constant 0 : index
      %20 = vector.load %arg5[%c0_18, %c0_19] : memref<1x4xf32, #tpu.memory_space<vmem>>, vector<1x4xf32>
      %21 = vector.broadcast %20 : vector<1x4xf32> to vector<2x4xf32>
      %22 = arith.addf %19, %21 : vector<2x4xf32>
      %cst_20 = arith.constant 2.500000e-01 : f32
      %23 = vector.broadcast %cst_20 : f32 to vector<2x4xf32>
      %24 = arith.mulf %22, %23 : vector<2x4xf32>
      %cst_21 = arith.constant dense<0xFF800000> : vector<2xf32>
      %25 = vector.multi_reduction <maximumf>, %24, %cst_21 [1] : vector<2x4xf32> to vector<2xf32>
      %26 = vector.shape_cast %25 : vector<2xf32> to vector<2x1xf32>
      %27 = vector.broadcast %26 : vector<2x1xf32> to vector<2x4xf32>
      %28 = arith.subf %24, %27 : vector<2x4xf32>
      %29 = math.exp %28 : vector<2x4xf32>
      %cst_22 = arith.constant dense<0.000000e+00> : vector<2xf32>
      %30 = vector.multi_reduction <add>, %29, %cst_22 [1] : vector<2x4xf32> to vector<2xf32>
      %31 = vector.shape_cast %30 : vector<2xf32> to vector<2x1xf32>
      %32 = tpu.reciprocal %31 {approx = true} : vector<2x1xf32> -> vector<2x1xf32>
      %33 = vector.broadcast %32 : vector<2x1xf32> to vector<2x4xf32>
      %34 = arith.mulf %29, %33 : vector<2x4xf32>
      %c0_23 = arith.constant 0 : index
      %c0_24 = arith.constant 0 : index
      %35 = vector.load %arg6[%c0_23, %c0_24] : memref<2x4xf32, #tpu.memory_space<vmem>>, vector<2x4xf32>
      tpu.vector_store %arg6[%c0_23, %c0_24], %34 {strides = array<i32>} : memref<2x4xf32, #tpu.memory_space<vmem>>, vector<2x4xf32>,
    } else {
    }
    return
  }
  func.func @transform_0(%arg0: i32, %arg1: i32) -> (i32, i32, i32) {
    %c0_i32 = arith.constant 0 : i32
    %c0_i32_0 = arith.constant 0 : i32
    return %arg0, %arg1, %c0_i32 : i32, i32, i32
  }
  func.func @transform_1(%arg0: i32, %arg1: i32) -> (i32, i32) {
    %c0_i32 = arith.constant 0 : i32
    %c0_i32_0 = arith.constant 0 : i32
    %c0_i32_1 = arith.constant 0 : i32
    return %c0_i32, %c0_i32_0 : i32, i32
  }
  func.func @transform_2(%arg0: i32, %arg1: i32) -> (i32, i32) {
    %c0_i32 = arith.constant 0 : i32
    %c0_i32_0 = arith.constant 0 : i32
    %c0_i32_1 = arith.constant 0 : i32
    return %c0_i32, %c0_i32_0 : i32, i32
  }
  func.func @transform_3(%arg0: i32, %arg1: i32) -> (i32, i32) {
    %c0_i32 = arith.constant 0 : i32
    %c0_i32_0 = arith.constant 0 : i32
    %c0_i32_1 = arith.constant 0 : i32
    return %c0_i32, %c0_i32_0 : i32, i32
  }
  func.func @transform_4(%arg0: i32, %arg1: i32) -> (i32, i32) {
    %c0_i32 = arith.constant 0 : i32
    %c0_i32_0 = arith.constant 0 : i32
    return %arg0, %c0_i32 : i32, i32
  }
}

</mosaic_0001>

<llo_original>
// kernel: tpu_custom_call.1
$region0: #{tpu_custom_call.1}
  #allocation0 [shape = 'u32[]', space=smem, size = 0x4, offset = 0x4, fixed_abs, tag = 'smem constant byte address 0x4 - core index']
  #allocation1 [shape = 'u32[144,128]{1,0:T(1,128)}', space=vmem, size = 0x12000, scoped, tag = 'internal scratch']
  #allocation2 [shape = 'f32[2,4]{1,0:T(2,128)}', space=vmem, size = 0x400, scoped, tag = 'scratch operand']
  %s0 = inlined_call_operand.vmem [shape: f32[2,256,4], index: 0, kind: input, shape index: {}]
  %s1 = inlined_call_operand.vmem [shape: f32[4,2], index: 1, kind: input, shape index: {}]
  %s2 = inlined_call_operand.vmem [shape: f32[2,4], index: 2, kind: input, shape index: {}]
  %s3 = inlined_call_operand.vmem [shape: f32[1,4], index: 3, kind: input, shape index: {}]
  %s4 = inlined_call_operand.hbm [shape: f32[2,4], index: 4, kind: output, shape index: {}]
  %s5 = sld [smem:[#allocation0]]
  $region95: #{tpu_custom_call.1} parent=0
    _
  %s7 = ssub.s32 1, %s5
  %s8 = scalar_select 0, %s7, %s5
  $region1: #{tpu_custom_call.1} parent=0
    #allocation3 [shape = 'u8[262144]{0}', space=vmem, size = 0x40000, scoped, tag = 'input window, operand 0']
    #allocation4 [shape = 'u8[1024]{0}', space=vmem, size = 0x400, scoped, tag = 'output window, operand 0, single buffered']
    #allocation5 [shape = 's32[2]{0}', space=sflag, size = 0x8, scoped, tag = 'scoped memory for tpu_custom_call.1']
    %9 = vsyncpa [#allocation5], 0
    loop: start=0, step=1, limit=4
    $region2: #{tpu_custom_call.1} parent=1 // loop_pre_header
      _
    $region3: #{tpu_custom_call.1} parent=1 // loop_header
      %s11 = sphi 0, %s15
      %p12 = scmp.ge.s32.totalorder %s11, 4
      %s18 = sphi 0, %s30
      %s19 = sphi 0, %s26
      %s20 = sphi 0, %s18
      %s21 = sphi 0, %s19
      %s22 = sphi 0, %s20
      %s23 = sphi 0, %s21
      %s35 = sphi 0, %s37
      %s38 = sphi 0, %s35
      %s39 = sphi 0, %s38
      %s55 = sphi 0, %s39
      %s59 = sphi 0, %s59
      %s61 = sphi 0, %s59
      %s62 = sphi 0, %s61
      %s76 = sphi 0, %s62
      %s80 = sphi 0, %s80
      %s82 = sphi 0, %s80
      %s83 = sphi 0, %s82
      %s97 = sphi 0, %s83
      %s101 = sphi 0, %s101
      %s103 = sphi 0, %s101
      %s104 = sphi 0, %s103
      %s118 = sphi 0, %s104
      %s124 = sphi 0, %s126
      %s127 = sphi 0, %s124
      %s128 = sphi 0, %s127
      %s144 = sphi 0, %s128
    $region4: #{tpu_custom_call.1} parent=1 // loop_header_branch
      %14 = sbr.rel (%p12) target = $region8
    $region5: #{tpu_custom_call.1} parent=1 // loop_body
      %s16 = ssub.s32 %s11, 1
      %s17 = ssub.s32 %s11, 2
      %s24 = sadd.s32 1, %s19
      %p25 = scmp.ge.s32.totalorder %s24, 2
      %s26 = scalar_select %p25, 0, %s24
      %s27 = sadd.s32 1, %s18
      %s28 = scalar_select %p25, %s27, %s18
      %p29 = scmp.ge.s32.totalorder %s28, 1
      %s30 = scalar_select %p29, 0, %s28
      %s31 = ssub.s32 %s18, %s30
      %s32 = ssub.s32 %s19, %s26
      %s33 = sor.u32 %s31, %s32
      %p34 = scmp.eq.s32.totalorder %s33, 0
      %s36 = sadd.s32 %s35, 1
      %s37 = scalar_select %p34, %s35, %s36
      %p40 = pneg %p34
      %p41 = scmp.eq.s32.totalorder %s11, 1
      %p42 = por %p40, %p41
      %p43 = scmp.ne.s32.totalorder %s35, %s38
      %p44 = scmp.eq.s32.totalorder %s11, 0
      %p45 = por %p43, %p44
      %p46 = scmp.ne.s32.totalorder %s35, %s38
      %p47 = scmp.eq.s32.totalorder %s16, 1
      %p48 = por %p46, %p47
      %p49 = scmp.ne.s32.totalorder %s38, %s39
      %p50 = scmp.eq.s32.totalorder %s16, 0
      %p51 = por %p49, %p50
      %p52 = scmp.ne.s32.totalorder %s38, %s39
      %p53 = scmp.eq.s32.totalorder %s17, 1
      %p54 = por %p52, %p53
      %p56 = scmp.ne.s32.totalorder %s39, %s55
      %p57 = scmp.eq.s32.totalorder %s17, 0
      %p58 = por %p56, %p57
      %s60 = sadd.s32 %s59, 1
      %p63 = scmp.eq.s32.totalorder %s11, 1
      %p64 = scmp.ne.s32.totalorder %s59, %s61
      %p65 = scmp.eq.s32.totalorder %s11, 0
      %p66 = por %p64, %p65
      %p67 = scmp.ne.s32.totalorder %s59, %s61
      %p68 = scmp.eq.s32.totalorder %s16, 1
      %p69 = por %p67, %p68
      %p70 = scmp.ne.s32.totalorder %s61, %s62
      %p71 = scmp.eq.s32.totalorder %s16, 0
      %p72 = por %p70, %p71
      %p73 = scmp.ne.s32.totalorder %s61, %s62
      %p74 = scmp.eq.s32.totalorder %s17, 1
      %p75 = por %p73, %p74
      %p77 = scmp.ne.s32.totalorder %s62, %s76
      %p78 = scmp.eq.s32.totalorder %s17, 0
      %p79 = por %p77, %p78
      %s81 = sadd.s32 %s80, 1
      %p84 = scmp.eq.s32.totalorder %s11, 1
      %p85 = scmp.ne.s32.totalorder %s80, %s82
      %p86 = scmp.eq.s32.totalorder %s11, 0
      %p87 = por %p85, %p86
      %p88 = scmp.ne.s32.totalorder %s80, %s82
      %p89 = scmp.eq.s32.totalorder %s16, 1
      %p90 = por %p88, %p89
      %p91 = scmp.ne.s32.totalorder %s82, %s83
      %p92 = scmp.eq.s32.totalorder %s16, 0
      %p93 = por %p91, %p92
      %p94 = scmp.ne.s32.totalorder %s82, %s83
      %p95 = scmp.eq.s32.totalorder %s17, 1
      %p96 = por %p94, %p95
      %p98 = scmp.ne.s32.totalorder %s83, %s97
      %p99 = scmp.eq.s32.totalorder %s17, 0
      %p100 = por %p98, %p99
      %s102 = sadd.s32 %s101, 1
      %p105 = scmp.eq.s32.totalorder %s11, 1
      %p106 = scmp.ne.s32.totalorder %s101, %s103
      %p107 = scmp.eq.s32.totalorder %s11, 0
      %p108 = por %p106, %p107
      %p109 = scmp.ne.s32.totalorder %s101, %s103
      %p110 = scmp.eq.s32.totalorder %s16, 1
      %p111 = por %p109, %p110
      %p112 = scmp.ne.s32.totalorder %s103, %s104
      %p113 = scmp.eq.s32.totalorder %s16, 0
      %p114 = por %p112, %p113
      %p115 = scmp.ne.s32.totalorder %s103, %s104
      %p116 = scmp.eq.s32.totalorder %s17, 1
      %p117 = por %p115, %p116
      %p119 = scmp.ne.s32.totalorder %s104, %s118
      %p120 = scmp.eq.s32.totalorder %s17, 0
      %p121 = por %p119, %p120
      %s122 = ssub.s32 %s18, %s30
      %p123 = scmp.eq.s32.totalorder %s122, 0
      %s125 = sadd.s32 %s124, 1
      %s126 = scalar_select %p123, %s124, %s125
      %p129 = pneg %p123
      %p130 = scmp.eq.s32.totalorder %s11, 1
      %p131 = por %p129, %p130
      %p132 = scmp.ne.s32.totalorder %s124, %s127
      %p133 = scmp.eq.s32.totalorder %s11, 0
      %p134 = por %p132, %p133
      %p135 = scmp.ne.s32.totalorder %s124, %s127
      %p136 = scmp.eq.s32.totalorder %s16, 1
      %p137 = por %p135, %p136
      %p138 = scmp.ne.s32.totalorder %s127, %s128
      %p139 = scmp.eq.s32.totalorder %s16, 0
      %p140 = por %p138, %p139
      %p141 = scmp.ne.s32.totalorder %s127, %s128
      %p142 = scmp.eq.s32.totalorder %s17, 1
      %p143 = por %p141, %p142
      %p145 = scmp.ne.s32.totalorder %s128, %s144
      %p146 = scmp.eq.s32.totalorder %s17, 0
      %p147 = por %p145, %p146
      %p148 = scmp.le.s32.totalorder 1, %s11
      %p149 = scmp.lt.s32.totalorder %s11, 3
      %p150 = pnand %p148, %p149
      %p151 = pneg %p150
      // Predicated region
      $region9: #{tpu_custom_call.1} parent=5 // pred_check
        _
      $region10: #{tpu_custom_call.1} parent=5 // pred_check_branch
        %153 = sbr.rel (%p150) target = $region12
      $region11: #{tpu_custom_call.1} parent=5 // pred_region
        %s154 = ssub.s32 %s11, 1
        // Predicated region
        $region13: #{tpu_custom_call.1} parent=11 // pred_check
          %p155 = pneg %p72
        $region14: #{tpu_custom_call.1} parent=11 // pred_check_branch
          %157 = sbr.rel (%p155) target = $region16
        $region15: #{tpu_custom_call.1} parent=11 // pred_region
          _
        $region16: #{tpu_custom_call.1} parent=11 // pred_fallthru
          _
        // Predicated region
        $region17: #{tpu_custom_call.1} parent=11 // pred_check
          %p158 = pneg %p93
        $region18: #{tpu_custom_call.1} parent=11 // pred_check_branch
          %160 = sbr.rel (%p158) target = $region20
        $region19: #{tpu_custom_call.1} parent=11 // pred_region
          _
        $region20: #{tpu_custom_call.1} parent=11 // pred_fallthru
          _
        // Predicated region
        $region21: #{tpu_custom_call.1} parent=11 // pred_check
          %p161 = pneg %p114
        $region22: #{tpu_custom_call.1} parent=11 // pred_check_branch
          %163 = sbr.rel (%p161) target = $region24
        $region23: #{tpu_custom_call.1} parent=11 // pred_region
          _
        $region24: #{tpu_custom_call.1} parent=11 // pred_fallthru
          _
      $region12: #{tpu_custom_call.1} parent=5 // pred_fallthru
        _
      %p164 = scmp.lt.s32.totalorder %s11, 2
      // Predicated region
      $region25: #{tpu_custom_call.1} parent=5 // pred_check
        %p165 = pneg %p164
      $region26: #{tpu_custom_call.1} parent=5 // pred_check_branch
        %167 = sbr.rel (%p165) target = $region28
      $region27: #{tpu_custom_call.1} parent=5 // pred_region
        // Predicated region
        $region29: #{tpu_custom_call.1} parent=27 // pred_check
          %p168 = pneg %p45
        $region30: #{tpu_custom_call.1} parent=27 // pred_check_branch
          %170 = sbr.rel (%p168) target = $region32
        $region31: #{tpu_custom_call.1} parent=27 // pred_region
          %s171 = sand.u32 %s35, 1
          %s172 = sand.u32 %s35, 1
          %s173 = smul.addr %s172, 256
          %s174 = scalar_lea.vmem [#allocation3], %s173
          %s175 = smul.u32 2, %s18
          %s176 = smul.u32 16, %s19
          %s177 = smul.addr %s175, 32
          %s178 = sadd.s32 %s176, %s177
          %s179 = smul.addr %s178, 8
          %s180 = scalar_lea.vmem %s0, %s179
          // Predicated region
          $region33: #{tpu_custom_call.1} parent=31 // pred_check
            _
          $region34: #{tpu_custom_call.1} parent=31 // pred_check_branch
            %182 = sbr.rel (0) target = $region36
          $region35: #{tpu_custom_call.1} parent=31 // pred_region
            // Predicated region
            $region37: #{tpu_custom_call.1} parent=35 // pred_check
              _
            $region38: #{tpu_custom_call.1} parent=35 // pred_check_branch
              %184 = sbr.rel (0) target = $region40
            $region39: #{tpu_custom_call.1} parent=35 // pred_region
              // Predicated region
              $region52: #{tpu_custom_call.1} parent=39 // pred_check
                _
              $region53: #{tpu_custom_call.1} parent=39 // pred_check_branch
                %262 = sbr.rel (0) target = $region55
              $region54: #{tpu_custom_call.1} parent=39 // pred_region
                loop: start=0, step=1, limit=1
                $region56: #{tpu_custom_call.1} parent=54 // loop_pre_header
                  _
                $region57: #{tpu_custom_call.1} parent=54 // loop_header
                  %s264 = sphi 0, %s268
                  %p265 = scmp.ge.s32.totalorder %s264, 1
                  %s269 = sphi %s180, %s180
                  %s270 = sphi %s174, %s174
                $region58: #{tpu_custom_call.1} parent=54 // loop_header_branch
                  %267 = sbr.rel (%p265) target = $region62
                $region59: #{tpu_custom_call.1} parent=54 // loop_body
                  %v271 = vld [vmem:[%s269] sm:$0xff]
                  %272 = vst [vmem:[%s270] sm:$0xff] %v271
                  %v273 = vld [vmem:[%s269 + $0x8] sm:$0xff]
                  %274 = vst [vmem:[%s270 + $0x8] sm:$0xff] %v273
                  %v275 = vld [vmem:[%s269 + $0x10] sm:$0xff]
                  %276 = vst [vmem:[%s270 + $0x10] sm:$0xff] %v275
                  %v277 = vld [vmem:[%s269 + $0x18] sm:$0xff]
                  %278 = vst [vmem:[%s270 + $0x18] sm:$0xff] %v277
                  %v279 = vld [vmem:[%s269 + $0x20] sm:$0xff]
                  %280 = vst [vmem:[%s270 + $0x20] sm:$0xff] %v279
                  %v281 = vld [vmem:[%s269 + $0x28] sm:$0xff]
                  %282 = vst [vmem:[%s270 + $0x28] sm:$0xff] %v281
                  %v283 = vld [vmem:[%s269 + $0x30] sm:$0xff]
                  %284 = vst [vmem:[%s270 + $0x30] sm:$0xff] %v283
                  %v285 = vld [vmem:[%s269 + $0x38] sm:$0xff]
                  %286 = vst [vmem:[%s270 + $0x38] sm:$0xff] %v285
                  %v287 = vld [vmem:[%s269 + $0x40] sm:$0xff]
                  %288 = vst [vmem:[%s270 + $0x40] sm:$0xff] %v287
                  %v289 = vld [vmem:[%s269 + $0x48] sm:$0xff]
                  %290 = vst [vmem:[%s270 + $0x48] sm:$0xff] %v289
                  %v291 = vld [vmem:[%s269 + $0x50] sm:$0xff]
                  %292 = vst [vmem:[%s270 + $0x50] sm:$0xff] %v291
                  %v293 = vld [vmem:[%s269 + $0x58] sm:$0xff]
                  %294 = vst [vmem:[%s270 + $0x58] sm:$0xff] %v293
                  %v295 = vld [vmem:[%s269 + $0x60] sm:$0xff]
                  %296 = vst [vmem:[%s270 + $0x60] sm:$0xff] %v295
                  %v297 = vld [vmem:[%s269 + $0x68] sm:$0xff]
                  %298 = vst [vmem:[%s270 + $0x68] sm:$0xff] %v297
                  %v299 = vld [vmem:[%s269 + $0x70] sm:$0xff]
                  %300 = vst [vmem:[%s270 + $0x70] sm:$0xff] %v299
                  %v301 = vld [vmem:[%s269 + $0x78] sm:$0xff]
                  %302 = vst [vmem:[%s270 + $0x78] sm:$0xff] %v301
                  %v303 = vld [vmem:[%s269 + $0x100] sm:$0xff]
                  %304 = vst [vmem:[%s270 + $0x80] sm:$0xff] %v303
                  %v305 = vld [vmem:[%s269 + $0x108] sm:$0xff]
                  %306 = vst [vmem:[%s270 + $0x88] sm:$0xff] %v305
                  %v307 = vld [vmem:[%s269 + $0x110] sm:$0xff]
                  %308 = vst [vmem:[%s270 + $0x90] sm:$0xff] %v307
                  %v309 = vld [vmem:[%s269 + $0x118] sm:$0xff]
                  %310 = vst [vmem:[%s270 + $0x98] sm:$0xff] %v309
                  %v311 = vld [vmem:[%s269 + $0x120] sm:$0xff]
                  %312 = vst [vmem:[%s270 + $0xa0] sm:$0xff] %v311
                  %v313 = vld [vmem:[%s269 + $0x128] sm:$0xff]
                  %314 = vst [vmem:[%s270 + $0xa8] sm:$0xff] %v313
                  %v315 = vld [vmem:[%s269 + $0x130] sm:$0xff]
                  %316 = vst [vmem:[%s270 + $0xb0] sm:$0xff] %v315
                  %v317 = vld [vmem:[%s269 + $0x138] sm:$0xff]
                  %318 = vst [vmem:[%s270 + $0xb8] sm:$0xff] %v317
                  %v319 = vld [vmem:[%s269 + $0x140] sm:$0xff]
                  %320 = vst [vmem:[%s270 + $0xc0] sm:$0xff] %v319
                  %v321 = vld [vmem:[%s269 + $0x148] sm:$0xff]
                  %322 = vst [vmem:[%s270 + $0xc8] sm:$0xff] %v321
                  %v323 = vld [vmem:[%s269 + $0x150] sm:$0xff]
                  %324 = vst [vmem:[%s270 + $0xd0] sm:$0xff] %v323
                  %v325 = vld [vmem:[%s269 + $0x158] sm:$0xff]
                  %326 = vst [vmem:[%s270 + $0xd8] sm:$0xff] %v325
                  %v327 = vld [vmem:[%s269 + $0x160] sm:$0xff]
                  %328 = vst [vmem:[%s270 + $0xe0] sm:$0xff] %v327
                  %v329 = vld [vmem:[%s269 + $0x168] sm:$0xff]
                  %330 = vst [vmem:[%s270 + $0xe8] sm:$0xff] %v329
                  %v331 = vld [vmem:[%s269 + $0x170] sm:$0xff]
                  %332 = vst [vmem:[%s270 + $0xf0] sm:$0xff] %v331
                  %v333 = vld [vmem:[%s269 + $0x178] sm:$0xff]
                  %334 = vst [vmem:[%s270 + $0xf8] sm:$0xff] %v333
                $region60: #{tpu_custom_call.1} parent=54 // loop_footer
                  %s268 = sadd.s32 1, %s264
                $region61: #{tpu_custom_call.1} parent=54 // loop_footer_branch
                  %263 = sbr.rel target = $region57
                $region62: #{tpu_custom_call.1} parent=54 // loop_exit
                  _
              $region55: #{tpu_custom_call.1} parent=39 // pred_fallthru
                _
              // Predicated region
              $region63: #{tpu_custom_call.1} parent=39 // pred_check
                _
              $region64: #{tpu_custom_call.1} parent=39 // pred_check_branch
                %336 = sbr.rel target = $region66
              $region65: #{tpu_custom_call.1} parent=39 // pred_region
                _
              $region66: #{tpu_custom_call.1} parent=39 // pred_fallthru
                _
            $region40: #{tpu_custom_call.1} parent=35 // pred_fallthru
              _
            // Predicated region
            $region41: #{tpu_custom_call.1} parent=35 // pred_check
              _
            $region42: #{tpu_custom_call.1} parent=35 // pred_check_branch
              %186 = sbr.rel target = $region44
            $region43: #{tpu_custom_call.1} parent=35 // pred_region
              %s188 = ssub.s32 256, 1
              loop: start=0, step=1, limit=1
              $region45: #{tpu_custom_call.1} parent=43 // loop_pre_header
                _
              $region46: #{tpu_custom_call.1} parent=43 // loop_header
                %s190 = sphi 0, %s194
                %p191 = scmp.ge.s32.totalorder %s190, 1
                %s195 = sphi %s180, %s180
                %s196 = sphi %s174, %s174
              $region47: #{tpu_custom_call.1} parent=43 // loop_header_branch
                %193 = sbr.rel (%p191) target = $region51
              $region48: #{tpu_custom_call.1} parent=43 // loop_body
                %v197 = vld [vmem:[%s195] sm:%s188]
                %198 = vst [vmem:[%s196] sm:%s188] %v197
                %v199 = vld [vmem:[%s195 + $0x8] sm:%s188]
                %200 = vst [vmem:[%s196 + $0x8] sm:%s188] %v199
                %v201 = vld [vmem:[%s195 + $0x10] sm:%s188]
                %202 = vst [vmem:[%s196 + $0x10] sm:%s188] %v201
                %v203 = vld [vmem:[%s195 + $0x18] sm:%s188]
                %204 = vst [vmem:[%s196 + $0x18] sm:%s188] %v203
                %v205 = vld [vmem:[%s195 + $0x20] sm:%s188]
                %206 = vst [vmem:[%s196 + $0x20] sm:%s188] %v205
                %v207 = vld [vmem:[%s195 + $0x28] sm:%s188]
                %208 = vst [vmem:[%s196 + $0x28] sm:%s188] %v207
                %v209 = vld [vmem:[%s195 + $0x30] sm:%s188]
                %210 = vst [vmem:[%s196 + $0x30] sm:%s188] %v209
                %v211 = vld [vmem:[%s195 + $0x38] sm:%s188]
                %212 = vst [vmem:[%s196 + $0x38] sm:%s188] %v211
                %v213 = vld [vmem:[%s195 + $0x40] sm:%s188]
                %214 = vst [vmem:[%s196 + $0x40] sm:%s188] %v213
                %v215 = vld [vmem:[%s195 + $0x48] sm:%s188]
                %216 = vst [vmem:[%s196 + $0x48] sm:%s188] %v215
                %v217 = vld [vmem:[%s195 + $0x50] sm:%s188]
                %218 = vst [vmem:[%s196 + $0x50] sm:%s188] %v217
                %v219 = vld [vmem:[%s195 + $0x58] sm:%s188]
                %220 = vst [vmem:[%s196 + $0x58] sm:%s188] %v219
                %v221 = vld [vmem:[%s195 + $0x60] sm:%s188]
                %222 = vst [vmem:[%s196 + $0x60] sm:%s188] %v221
                %v223 = vld [vmem:[%s195 + $0x68] sm:%s188]
                %224 = vst [vmem:[%s196 + $0x68] sm:%s188] %v223
                %v225 = vld [vmem:[%s195 + $0x70] sm:%s188]
                %226 = vst [vmem:[%s196 + $0x70] sm:%s188] %v225
                %v227 = vld [vmem:[%s195 + $0x78] sm:%s188]
                %228 = vst [vmem:[%s196 + $0x78] sm:%s188] %v227
                %v229 = vld [vmem:[%s195 + $0x100] sm:%s188]
                %230 = vst [vmem:[%s196 + $0x80] sm:%s188] %v229
                %v231 = vld [vmem:[%s195 + $0x108] sm:%s188]
                %232 = vst [vmem:[%s196 + $0x88] sm:%s188] %v231
                %v233 = vld [vmem:[%s195 + $0x110] sm:%s188]
                %234 = vst [vmem:[%s196 + $0x90] sm:%s188] %v233
                %v235 = vld [vmem:[%s195 + $0x118] sm:%s188]
                %236 = vst [vmem:[%s196 + $0x98] sm:%s188] %v235
                %v237 = vld [vmem:[%s195 + $0x120] sm:%s188]
                %238 = vst [vmem:[%s196 + $0xa0] sm:%s188] %v237
                %v239 = vld [vmem:[%s195 + $0x128] sm:%s188]
                %240 = vst [vmem:[%s196 + $0xa8] sm:%s188] %v239
                %v241 = vld [vmem:[%s195 + $0x130] sm:%s188]
                %242 = vst [vmem:[%s196 + $0xb0] sm:%s188] %v241
                %v243 = vld [vmem:[%s195 + $0x138] sm:%s188]
                %244 = vst [vmem:[%s196 + $0xb8] sm:%s188] %v243
                %v245 = vld [vmem:[%s195 + $0x140] sm:%s188]
                %246 = vst [vmem:[%s196 + $0xc0] sm:%s188] %v245
                %v247 = vld [vmem:[%s195 + $0x148] sm:%s188]
                %248 = vst [vmem:[%s196 + $0xc8] sm:%s188] %v247
                %v249 = vld [vmem:[%s195 + $0x150] sm:%s188]
                %250 = vst [vmem:[%s196 + $0xd0] sm:%s188] %v249
                %v251 = vld [vmem:[%s195 + $0x158] sm:%s188]
                %252 = vst [vmem:[%s196 + $0xd8] sm:%s188] %v251
                %v253 = vld [vmem:[%s195 + $0x160] sm:%s188]
                %254 = vst [vmem:[%s196 + $0xe0] sm:%s188] %v253
                %v255 = vld [vmem:[%s195 + $0x168] sm:%s188]
                %256 = vst [vmem:[%s196 + $0xe8] sm:%s188] %v255
                %v257 = vld [vmem:[%s195 + $0x170] sm:%s188]
                %258 = vst [vmem:[%s196 + $0xf0] sm:%s188] %v257
                %v259 = vld [vmem:[%s195 + $0x178] sm:%s188]
                %260 = vst [vmem:[%s196 + $0xf8] sm:%s188] %v259
              $region49: #{tpu_custom_call.1} parent=43 // loop_footer
                %s194 = sadd.s32 1, %s190
              $region50: #{tpu_custom_call.1} parent=43 // loop_footer_branch
                %189 = sbr.rel target = $region46
              $region51: #{tpu_custom_call.1} parent=43 // loop_exit
                _
            $region44: #{tpu_custom_call.1} parent=35 // pred_fallthru
              _
          $region36: #{tpu_custom_call.1} parent=31 // pred_fallthru
            _
          %337 = vnop
        $region32: #{tpu_custom_call.1} parent=27 // pred_fallthru
          _
      $region28: #{tpu_custom_call.1} parent=5 // pred_fallthru
        _
      %p338 = scmp.le.s32.totalorder 1, %s11
      %p339 = scmp.lt.s32.totalorder %s11, 3
      %p340 = pnand %p338, %p339
      %p341 = pneg %p340
      // Predicated region
      $region67: #{tpu_custom_call.1} parent=5 // pred_check
        _
      $region68: #{tpu_custom_call.1} parent=5 // pred_check_branch
        %343 = sbr.rel (%p340) target = $region70
      $region69: #{tpu_custom_call.1} parent=5 // pred_region
        %s344 = ssub.s32 %s11, 1
        %s345 = sand.u32 %s38, 1
        %s346 = sand.u32 %s38, 1
        %s347 = smul.addr %s346, 256
        %s348 = scalar_lea.vmem [#allocation3], %s347
        // Predicated region
        $region71: #{tpu_custom_call.1} parent=69 // pred_check
          %p349 = pneg %p51
        $region72: #{tpu_custom_call.1} parent=69 // pred_check_branch
          %351 = sbr.rel (%p349) target = $region74
        $region73: #{tpu_custom_call.1} parent=69 // pred_region
          _
        $region74: #{tpu_custom_call.1} parent=69 // pred_fallthru
          _
        %s352 = sand.u32 %s38, 1
        %s353 = sand.u32 %s38, 1
        %s354 = smul.addr %s353, 256
        %s355 = scalar_lea.vmem [#allocation3], %s354
        %p356 = pneg %p51
        %p357 = pneg %p48
        %p358 = pneg %p72
        %p359 = pneg %p69
        %p360 = pneg %p93
        %p361 = pneg %p90
        %p362 = pneg %p114
        %p363 = pneg %p111
        %p364 = pneg %p140
        %p365 = pneg %p137
        %s366 = smul.u32 2, %s20
        %s367 = smul.u32 16, %s21
        %p368 = scmp.eq.s32.totalorder %s21, 0
        // Predicated region
        $region75: #{tpu_custom_call.1} parent=69 // pred_check
          %p369 = pneg %p368
        $region76: #{tpu_custom_call.1} parent=69 // pred_check_branch
          %371 = sbr.rel (%p369) target = $region78
        $region77: #{tpu_custom_call.1} parent=69 // pred_region
          %vm372 = vcmask 25600
          %373 = vst.msk [vmem:[#allocation2] sm:$0x3] %vm372, 0.0
        $region78: #{tpu_custom_call.1} parent=69 // pred_fallthru
          _
        %v374 = vld [vmem:[#allocation2] sm:$0x3]
        %v375 = vld [vmem:[%s348] sm:$0xff]
        %v376 = vld [vmem:[%s348 + $0x8] sm:$0xff]
        %v377 = vld [vmem:[%s348 + $0x10] sm:$0xff]
        %v378 = vld [vmem:[%s348 + $0x18] sm:$0xff]
        %v379 = vld [vmem:[%s348 + $0x20] sm:$0xff]
        %v380 = vld [vmem:[%s348 + $0x28] sm:$0xff]
        %v381 = vld [vmem:[%s348 + $0x30] sm:$0xff]
        %v382 = vld [vmem:[%s348 + $0x38] sm:$0xff]
        %v383 = vld [vmem:[%s348 + $0x40] sm:$0xff]
        %v384 = vld [vmem:[%s348 + $0x48] sm:$0xff]
        %v385 = vld [vmem:[%s348 + $0x50] sm:$0xff]
        %v386 = vld [vmem:[%s348 + $0x58] sm:$0xff]
        %v387 = vld [vmem:[%s348 + $0x60] sm:$0xff]
        %v388 = vld [vmem:[%s348 + $0x68] sm:$0xff]
        %v389 = vld [vmem:[%s348 + $0x70] sm:$0xff]
        %v390 = vld [vmem:[%s348 + $0x78] sm:$0xff]
        %v391 = vld [vmem:[%s348 + $0x80] sm:$0xff]
        %v392 = vld [vmem:[%s348 + $0x88] sm:$0xff]
        %v393 = vld [vmem:[%s348 + $0x90] sm:$0xff]
        %v394 = vld [vmem:[%s348 + $0x98] sm:$0xff]
        %v395 = vld [vmem:[%s348 + $0xa0] sm:$0xff]
        %v396 = vld [vmem:[%s348 + $0xa8] sm:$0xff]
        %v397 = vld [vmem:[%s348 + $0xb0] sm:$0xff]
        %v398 = vld [vmem:[%s348 + $0xb8] sm:$0xff]
        %v399 = vld [vmem:[%s348 + $0xc0] sm:$0xff]
        %v400 = vld [vmem:[%s348 + $0xc8] sm:$0xff]
        %v401 = vld [vmem:[%s348 + $0xd0] sm:$0xff]
        %v402 = vld [vmem:[%s348 + $0xd8] sm:$0xff]
        %v403 = vld [vmem:[%s348 + $0xe0] sm:$0xff]
        %v404 = vld [vmem:[%s348 + $0xe8] sm:$0xff]
        %v405 = vld [vmem:[%s348 + $0xf0] sm:$0xff]
        %v406 = vld [vmem:[%s348 + $0xf8] sm:$0xff]
        %vm407 = vcmask 31744
        %v408 = vsel %vm407, %v375, 0.0
        %v409 = vsel %vm407, %v376, 0.0
        %v410 = vadd.f32 %v408, %v409
        %v411 = vsel %vm407, %v377, 0.0
        %v412 = vadd.f32 %v410, %v411
        %v413 = vsel %vm407, %v378, 0.0
        %v414 = vadd.f32 %v412, %v413
        %v415 = vsel %vm407, %v379, 0.0
        %v416 = vadd.f32 %v414, %v415
        %v417 = vsel %vm407, %v380, 0.0
        %v418 = vadd.f32 %v416, %v417
        %v419 = vsel %vm407, %v381, 0.0
        %v420 = vadd.f32 %v418, %v419
        %v421 = vsel %vm407, %v382, 0.0
        %v422 = vadd.f32 %v420, %v421
        %v423 = vsel %vm407, %v383, 0.0
        %v424 = vadd.f32 %v422, %v423
        %v425 = vsel %vm407, %v384, 0.0
        %v426 = vadd.f32 %v424, %v425
        %v427 = vsel %vm407, %v385, 0.0
        %v428 = vadd.f32 %v426, %v427
        %v429 = vsel %vm407, %v386, 0.0
        %v430 = vadd.f32 %v428, %v429
        %v431 = vsel %vm407, %v387, 0.0
        %v432 = vadd.f32 %v430, %v431
        %v433 = vsel %vm407, %v388, 0.0
        %v434 = vadd.f32 %v432, %v433
        %v435 = vsel %vm407, %v389, 0.0
        %v436 = vadd.f32 %v434, %v435
        %v437 = vsel %vm407, %v390, 0.0
        %v438 = vadd.f32 %v436, %v437
        %v439 = vrot.slane %v438, 4
        %v440 = vadd.f32 %v438, %v439
        %v441 = vrot.slane %v440, 2
        %v442 = vadd.f32 %v440, %v441
        %v443 = vrot.slane %v442, 1
        %v444 = vadd.f32 %v442, %v443
        %v445 = vsel %vm407, %v391, 0.0
        %v446 = vsel %vm407, %v392, 0.0
        %v447 = vadd.f32 %v445, %v446
        %v448 = vsel %vm407, %v393, 0.0
        %v449 = vadd.f32 %v447, %v448
        %v450 = vsel %vm407, %v394, 0.0
        %v451 = vadd.f32 %v449, %v450
        %v452 = vsel %vm407, %v395, 0.0
        %v453 = vadd.f32 %v451, %v452
        %v454 = vsel %vm407, %v396, 0.0
        %v455 = vadd.f32 %v453, %v454
        %v456 = vsel %vm407, %v397, 0.0
        %v457 = vadd.f32 %v455, %v456
        %v458 = vsel %vm407, %v398, 0.0
        %v459 = vadd.f32 %v457, %v458
        %v460 = vsel %vm407, %v399, 0.0
        %v461 = vadd.f32 %v459, %v460
        %v462 = vsel %vm407, %v400, 0.0
        %v463 = vadd.f32 %v461, %v462
        %v464 = vsel %vm407, %v401, 0.0
        %v465 = vadd.f32 %v463, %v464
        %v466 = vsel %vm407, %v402, 0.0
        %v467 = vadd.f32 %v465, %v466
        %v468 = vsel %vm407, %v403, 0.0
        %v469 = vadd.f32 %v467, %v468
        %v470 = vsel %vm407, %v404, 0.0
        %v471 = vadd.f32 %v469, %v470
        %v472 = vsel %vm407, %v405, 0.0
        %v473 = vadd.f32 %v471, %v472
        %v474 = vsel %vm407, %v406, 0.0
        %v475 = vadd.f32 %v473, %v474
        %v476 = vrot.slane %v475, 4
        %v477 = vadd.f32 %v475, %v476
        %v478 = vrot.slane %v477, 2
        %v479 = vadd.f32 %v477, %v478
        %v480 = vrot.slane %v479, 1
        %v481 = vadd.f32 %v479, %v480
        %vm484 = vcmask 1041409
        %v485 = vsel %vm484, %v481, %v444
        %v487 = vadd.f32 %v374, %v485
        %vm488 = vcmask 25600
        %489 = vst.msk [vmem:[#allocation2] sm:$0x3] %vm488, %v487
        %p490 = scmp.eq.s32.totalorder %s21, 1
        // Predicated region
        $region79: #{tpu_custom_call.1} parent=69 // pred_check
          %p491 = pneg %p490
        $region80: #{tpu_custom_call.1} parent=69 // pred_check_branch
          %493 = sbr.rel (%p491) target = $region82
        $region81: #{tpu_custom_call.1} parent=69 // pred_region
          %v494 = vld [vmem:[#allocation2] sm:$0x3]
          %v495 = vmul.f32 %v494, 0.00390625
          %v496 = vld [vmem:[%s1] sm:$0xf]
          %v498 = vsel %vm407, %v495, 0
          %vm500 = vcmask 1043456
          %v502 = vsel %vm500, %v496, 0
          %504 = vmatprep.subr.mxu0 0.0
          %505 = vmatpush1.msra.mxu0 0.0
          %506 = vmatprep.subr.mxu0 0.0
          %507 = vmatpush1.msra.mxu0 0.0
          %508 = vmatprep.subr.mxu0 0.0
          %509 = vmatpush1.msra.mxu0 0.0
          %510 = vmatprep.subr.mxu0 0.0
          %511 = vmatpush1.msra.mxu0 0.0
          %512 = vmatprep.subr.mxu0 0.0
          %513 = vmatpush1.msra.mxu0 0.0
          %514 = vmatprep.subr.mxu0 0.0
          %515 = vmatpush1.msra.mxu0 0.0
          %516 = vmatprep.subr.mxu0 0.0
          %517 = vmatpush1.msra.mxu0 0.0
          %518 = vmatprep.subr.mxu0 0.0
          %519 = vmatpush1.msra.mxu0 0.0
          %520 = vmatprep.subr.mxu0 0.0
          %521 = vmatpush1.msra.mxu0 0.0
          %522 = vmatprep.subr.mxu0 0.0
          %523 = vmatpush1.msra.mxu0 0.0
          %524 = vmatprep.subr.mxu0 0.0
          %525 = vmatpush1.msra.mxu0 0.0
          %526 = vmatprep.subr.mxu0 0.0
          %527 = vmatpush1.msra.mxu0 0.0
          %528 = vmatprep.subr.mxu0 0.0
          %529 = vmatpush1.msra.mxu0 0.0
          %530 = vmatprep.subr.mxu0 0.0
          %531 = vmatpush1.msra.mxu0 0.0
          %532 = vmatprep.subr.mxu0 0.0
          %533 = vmatpush1.msra.mxu0 0.0
          %534 = vmatprep.subr.mxu0 0.0
          %535 = vmatpush1.msra.mxu0 %v502
          %536 = vmatprep.subr.mxu0 0.0
          %537 = vmatpush2.msra.mxu0 0.0
          %538 = vmatprep.subr.mxu0 0.0
          %539 = vmatpush2.msra.mxu0 0.0
          %540 = vmatprep.subr.mxu0 0.0
          %541 = vmatpush2.msra.mxu0 0.0
          %542 = vmatprep.subr.mxu0 0.0
          %543 = vmatpush2.msra.mxu0 0.0
          %544 = vmatprep.subr.mxu0 0.0
          %545 = vmatpush2.msra.mxu0 0.0
          %546 = vmatprep.subr.mxu0 0.0
          %547 = vmatpush2.msra.mxu0 0.0
          %548 = vmatprep.subr.mxu0 0.0
          %549 = vmatpush2.msra.mxu0 0.0
          %550 = vmatprep.subr.mxu0 0.0
          %551 = vmatpush2.msra.mxu0 0.0
          %552 = vmatprep.subr.mxu0 0.0
          %553 = vmatpush2.msra.mxu0 0.0
          %554 = vmatprep.subr.mxu0 0.0
          %555 = vmatpush2.msra.mxu0 0.0
          %556 = vmatprep.subr.mxu0 0.0
          %557 = vmatpush2.msra.mxu0 0.0
          %558 = vmatprep.subr.mxu0 0.0
          %559 = vmatpush2.msra.mxu0 0.0
          %560 = vmatprep.subr.mxu0 0.0
          %561 = vmatpush2.msra.mxu0 0.0
          %562 = vmatprep.subr.mxu0 0.0
          %563 = vmatpush2.msra.mxu0 0.0
          %564 = vmatprep.subr.mxu0 0.0
          %565 = vmatpush2.msra.mxu0 0.0
          %566 = vmatprep.subr.mxu0 0.0
          %567 = vmatpush2.msra.mxu0 0.0
          %568 = vmatprep.mubr.f32.mxu0 0.0
          %569 = vmatmul.mubr.f32.gmra.mxu0 %v498
          %v570 = vpop.f32.mrf.mxu0
          %v571 = vadd.f32 0.0, %v570
          %v572 = vpop.f32.mrf.mxu0
          %573 = vdwg.mxu0
          %v574 = vmax.f32 %v571, 0.0
          %v575 = vld [vmem:[%s2] sm:$0x3]
          %v576 = vld [vmem:[%s3] sm:$0x1]
          %v578 = vlaneseq
          %v579 = vshrl.u32 %v578, 7
          %v580 = vsub.s32 0, %v579
          %v581 = vrot.slane %v576, %v580
          %vm583 = vcmask 15360
          %v585 = vsel %vm583, %v574, 0
          %vm587 = vcmask 1041408
          %v589 = vsel %vm587, %v575, 0
          %591 = vmatprep.subr.mxu0 0.0
          %592 = vmatpush1.msra.mxu0 0.0
          %593 = vmatprep.subr.mxu0 0.0
          %594 = vmatpush1.msra.mxu0 0.0
          %595 = vmatprep.subr.mxu0 0.0
          %596 = vmatpush1.msra.mxu0 0.0
          %597 = vmatprep.subr.mxu0 0.0
          %598 = vmatpush1.msra.mxu0 0.0
          %599 = vmatprep.subr.mxu0 0.0
          %600 = vmatpush1.msra.mxu0 0.0
          %601 = vmatprep.subr.mxu0 0.0
          %602 = vmatpush1.msra.mxu0 0.0
          %603 = vmatprep.subr.mxu0 0.0
          %604 = vmatpush1.msra.mxu0 0.0
          %605 = vmatprep.subr.mxu0 0.0
          %606 = vmatpush1.msra.mxu0 0.0
          %607 = vmatprep.subr.mxu0 0.0
          %608 = vmatpush1.msra.mxu0 0.0
          %609 = vmatprep.subr.mxu0 0.0
          %610 = vmatpush1.msra.mxu0 0.0
          %611 = vmatprep.subr.mxu0 0.0
          %612 = vmatpush1.msra.mxu0 0.0
          %613 = vmatprep.subr.mxu0 0.0
          %614 = vmatpush1.msra.mxu0 0.0
          %615 = vmatprep.subr.mxu0 0.0
          %616 = vmatpush1.msra.mxu0 0.0
          %617 = vmatprep.subr.mxu0 0.0
          %618 = vmatpush1.msra.mxu0 0.0
          %619 = vmatprep.subr.mxu0 0.0
          %620 = vmatpush1.msra.mxu0 0.0
          %621 = vmatprep.subr.mxu0 0.0
          %622 = vmatpush1.msra.mxu0 %v589
          %623 = vmatprep.subr.mxu0 0.0
          %624 = vmatpush2.msra.mxu0 0.0
          %625 = vmatprep.subr.mxu0 0.0
          %626 = vmatpush2.msra.mxu0 0.0
          %627 = vmatprep.subr.mxu0 0.0
          %628 = vmatpush2.msra.mxu0 0.0
          %629 = vmatprep.subr.mxu0 0.0
          %630 = vmatpush2.msra.mxu0 0.0
          %631 = vmatprep.subr.mxu0 0.0
          %632 = vmatpush2.msra.mxu0 0.0
          %633 = vmatprep.subr.mxu0 0.0
          %634 = vmatpush2.msra.mxu0 0.0
          %635 = vmatprep.subr.mxu0 0.0
          %636 = vmatpush2.msra.mxu0 0.0
          %637 = vmatprep.subr.mxu0 0.0
          %638 = vmatpush2.msra.mxu0 0.0
          %639 = vmatprep.subr.mxu0 0.0
          %640 = vmatpush2.msra.mxu0 0.0
          %641 = vmatprep.subr.mxu0 0.0
          %642 = vmatpush2.msra.mxu0 0.0
          %643 = vmatprep.subr.mxu0 0.0
          %644 = vmatpush2.msra.mxu0 0.0
          %645 = vmatprep.subr.mxu0 0.0
          %646 = vmatpush2.msra.mxu0 0.0
          %647 = vmatprep.subr.mxu0 0.0
          %648 = vmatpush2.msra.mxu0 0.0
          %649 = vmatprep.subr.mxu0 0.0
          %650 = vmatpush2.msra.mxu0 0.0
          %651 = vmatprep.subr.mxu0 0.0
          %652 = vmatpush2.msra.mxu0 0.0
          %653 = vmatprep.subr.mxu0 0.0
          %654 = vmatpush2.msra.mxu0 0.0
          %655 = vmatprep.mubr.f32.mxu0 0.0
          %656 = vmatmul.mubr.f32.gmra.mxu0 %v585
          %v657 = vpop.f32.mrf.mxu0
          %v658 = vadd.f32 %v581, %v657
          %v659 = vpop.f32.mrf.mxu0
          %660 = vdwg.mxu0
          %v661 = vmul.f32 %v658, 0.25
          %v662 = vsel %vm488, %v661, -inf
          %663 = vmax.xlane.f32.xlu0 %v662
          %v664 = vpop.xlane.xlu0 %663
          %v665 = vsub.f32 %v661, %v664
          %v666 = vmul.f32 %v665, 1.442695
          %v667 = vpow.pop %v666
          %v668 = vsel %vm488, %v667, 0.0
          %669 = vadd.xlane.f32.xlu0 %v668
          %v670 = vpop.xlane.xlu0 %669
          %v671 = vrcp.pop %v670
          %v672 = vmul.f32 %v667, %v671
          %673 = vst.msk [vmem:[#allocation4] sm:$0x3] %vm488, %v672
        $region82: #{tpu_custom_call.1} parent=69 // pred_fallthru
          _
        // Predicated region
        $region83: #{tpu_custom_call.1} parent=69 // pred_check
          %p674 = pneg %p137
        $region84: #{tpu_custom_call.1} parent=69 // pred_check_branch
          %676 = sbr.rel (%p674) target = $region86
        $region85: #{tpu_custom_call.1} parent=69 // pred_region
          %s678 = ssub.s32 32, 32
          %679 = vsyncadd [#allocation5], %s678
          %s680 = smul.addr %s20, 32
          %s681 = scalar_lea.hbm %s4, %s680
          %s683 = sshll.u32 [#allocation4], 4
          %s684 = int_to_ptr.vmem [resolvable:$true] %s683
          %686 = dma.vmem_to_hbm [thread:$0]  %s684, 32, %s681, [#allocation5]
        $region86: #{tpu_custom_call.1} parent=69 // pred_fallthru
          _
        // Predicated region
        $region87: #{tpu_custom_call.1} parent=69 // pred_check
          %p687 = pneg %p137
        $region88: #{tpu_custom_call.1} parent=69 // pred_check_branch
          %689 = sbr.rel (%p687) target = $region90
        $region89: #{tpu_custom_call.1} parent=69 // pred_region
          %690 = dma.done [#allocation5], 32
        $region90: #{tpu_custom_call.1} parent=69 // pred_fallthru
          _
      $region70: #{tpu_custom_call.1} parent=5 // pred_fallthru
        _
      %p691 = scmp.le.s32.totalorder 2, %s11
      // Predicated region
      $region91: #{tpu_custom_call.1} parent=5 // pred_check
        %p692 = pneg %p691
      $region92: #{tpu_custom_call.1} parent=5 // pred_check_branch
        %694 = sbr.rel (%p692) target = $region94
      $region93: #{tpu_custom_call.1} parent=5 // pred_region
        %s695 = ssub.s32 %s11, 2
      $region94: #{tpu_custom_call.1} parent=5 // pred_fallthru
        _
    $region6: #{tpu_custom_call.1} parent=1 // loop_footer
      %s15 = sadd.s32 1, %s11
    $region7: #{tpu_custom_call.1} parent=1 // loop_footer_branch
      %10 = sbr.rel target = $region3
    $region8: #{tpu_custom_call.1} parent=1 // loop_exit
      _
    %696 = vsyncpa [#allocation5], 1
    %s697 = scalar_lea.sflag [#allocation5], 1
    %698 = vsyncpa %s697, 1

</llo_original>
